<compile_context>
chip_gen: v5e
topology: v5e:2x2
jax: 0.10.0
libtpu: 0.0.40
codegen_flags: <defaults>
</compile_context>

<pallas_src>
import numpy as np
import jax
import jax.numpy as jnp
from jax import lax
from jax.experimental import pallas as pl
from jax.experimental.pallas import tpu as pltpu


# ----------------------------- FPS kernel -----------------------------------
def _fps_kernel(init_ref, coords_ref, idx_ref, dist_ref):
    """Batched iterative farthest point sampling.

    init_ref:   VMEM (Bblk, 1)      int32 -- initial 'farthest' index per batch row
    coords_ref: VMEM (D, Bblk, N)   f32   -- coordinate planes (batch on sublanes, N on lanes)
    idx_ref:    VMEM (Bblk, npoint) int32 -- sampled indices (masked column store per iter)
    dist_ref:   VMEM (Bblk, N)      f32   -- running min distance (scratch, not a carry)
    """
    D, Bblk, N = coords_ref.shape
    npoint = idx_ref.shape[1]

    lane_iota = lax.broadcasted_iota(jnp.int32, (Bblk, N), 1)        # point ids
    col_iota = lax.broadcasted_iota(jnp.int32, (Bblk, npoint), 1)    # output column ids
    sentinel = jnp.int32(N)

    # Reset the running distances for this batch block (matches torch's 100000000.0).
    dist_ref[...] = jnp.full((Bblk, N), 1e8, dtype=jnp.float32)

    def body(i, far_col):                                            # far_col: (Bblk, 1) int32
        # idx[:, i] = farthest -- masked lane-dense store, no carried centroid vector.
        pltpu.store(idx_ref,
                    jnp.broadcast_to(far_col, (Bblk, npoint)),
                    mask=(col_iota == i))

        # centroid extraction via one-hot lane reductions; dist = sum_d (x_d - c_d)^2,
        # summed in the same order as the torch reference (bit-matching distances).
        onehot = (lane_iota == far_col).astype(jnp.float32)          # (Bblk, N)
        dist = None
        for d in range(D):
            plane = coords_ref[d]                                    # streamed from VMEM
            cd = jnp.sum(plane * onehot, axis=1, keepdims=True)      # (Bblk, 1) = coords[b, far, d]
            diff = plane - cd
            sq = diff * diff
            dist = sq if dist is None else dist + sq

        # distances[mask] = dist[mask]  <=>  running minimum (kept in VMEM scratch)
        distances = jnp.minimum(dist_ref[...], dist)
        dist_ref[...] = distances

        # argmax with first-occurrence tie-break, int32-keyed (matches jnp.argmax/torch.max)
        maxval = jnp.max(distances, axis=1, keepdims=True)           # (Bblk, 1)
        cand = jnp.where(distances == maxval, lane_iota, sentinel)
        return jnp.min(cand, axis=1, keepdims=True)                  # (Bblk, 1) int32

    lax.fori_loop(0, npoint, body, init_ref[...])


def _pick_batch_block(B, D, N):
    """Largest multiple-of-8 batch block that fits VMEM, preferring >=2 grid steps (v7x)."""
    budget = 12 * 1024 * 1024  # double-buffered coords block + distance scratch, any TPU gen

    def fits(c):
        return (2 * D * c * N + c * N) * 4 <= budget

    cands = [c for c in (32, 24, 16, 8) if B % c == 0]
    fitting = [c for c in cands if fits(c)]
    pool = fitting or cands[-1:]
    for c in pool:
        if B // c >= 2:                    # keep both TensorCores busy on v7x when possible
            return c
    return pool[0] if pool else B


def farthest_point_sample_pallas(coords, npoint, init_farthest):
    """coords: (B, N, D) float, init_farthest: (B,) int -> (B, npoint) int32 indices."""
    B, N, D = coords.shape
    coords_p = jnp.transpose(coords, (2, 0, 1)).astype(jnp.float32)   # (D, B, N)
    init_col = init_farthest.astype(jnp.int32).reshape(B, 1)          # (B, 1)

    bblk = _pick_batch_block(B, D, N)
    grid = (B // bblk,) if B % bblk == 0 else (1,)
    if grid == (1,):
        bblk = B

    return pl.pallas_call(
        _fps_kernel,
        out_shape=jax.ShapeDtypeStruct((B, npoint), jnp.int32),
        grid=grid,
        in_specs=[
            pl.BlockSpec((bblk, 1), lambda b: (b, 0)),
            pl.BlockSpec((D, bblk, N), lambda b: (0, b, 0)),
        ],
        out_specs=pl.BlockSpec((bblk, npoint), lambda b: (b, 0)),
        scratch_shapes=[pltpu.VMEM((bblk, N), jnp.float32)],
        compiler_params=pltpu.CompilerParams(dimension_semantics=("parallel",)),
    )(init_col, coords_p)


# --------------------------- fused gather (index_points) ---------------------
def _make_gather_kernel(n_tensors, tiled):
    """Gather rows idx[b, :] from n_tensors (B, N, C_i) inputs with ONE shared one-hot.

    Lane-dense orientation: one-hot is (tn, S), output/accumulator is channel-major (C_i, S).
    """
    def kernel(*refs):
        idx_ref = refs[0]                                   # (1, 1, S) int32
        pts_refs = refs[1:1 + n_tensors]                    # each (1, tn, C_i)
        out_refs = refs[1 + n_tensors:1 + 2 * n_tensors]    # each (1, C_i, S)
        acc_refs = refs[1 + 2 * n_tensors:]                 # each (C_i, S) f32 (tiled only)

        tn = pts_refs[0].shape[1]
        S = idx_ref.shape[2]
        idx_row = idx_ref[0]                                # (1, S)
        base = pl.program_id(1) * tn if tiled else 0
        row_iota = lax.broadcasted_iota(jnp.int32, (tn, S), 0) + base
        sel = row_iota == idx_row                           # (tn, S) bool, shared by all dots

        def gather_dot(pts_ref):
            pts = pts_ref[0]                                # (tn, C_i)
            onehot = sel.astype(pts.dtype)                  # bf16 inputs stay bf16 on the MXU
            return lax.dot_general(                         # -> (C_i, S), lane-dense
                pts, onehot, (((0,), (0,)), ((), ())),
                preferred_element_type=jnp.float32,
                precision=lax.Precision.HIGHEST)            # exact f32 gather

        if not tiled:
            # Single contraction tile: no scratch, write results straight out.
            for pts_ref, out_ref in zip(pts_refs, out_refs):
                out_ref[0] = gather_dot(pts_ref).astype(out_ref.dtype)
            return

        parts = [gather_dot(p) for p in pts_refs]
        k = pl.program_id(1)

        @pl.when(k == 0)
        def _():
            for acc, part in zip(acc_refs, parts):
                acc[...] = part                             # direct write, no zero-init pass

        @pl.when(k > 0)
        def _():
            for acc, part in zip(acc_refs, parts):
                acc[...] += part

        @pl.when(k == pl.num_programs(1) - 1)
        def _():
            for out_ref, acc in zip(out_refs, acc_refs):
                out_ref[0] = acc[...].astype(out_ref.dtype)

    return kernel


def _pick_tn(N, S, itemsize):
    """Contraction tile so the materialized (tn, S) one-hot stays VMEM-safe on every gen."""
    budget = 2 * 1024 * 1024
    max_tn = max(128, budget // max(S * itemsize, 1))
    if N <= max_tn:
        return N
    for cand in (4096, 2048, 1024, 512, 256, 128):
        if cand <= max_tn and N % cand == 0:
            return cand
    return N


def index_points_pallas(points_list, idx):
    """points_list: list of (B, N, C_i); idx: (B, S) int -> list of (B, S, C_i)."""
    B, S = idx.shape
    N = points_list[0].shape[1]
    idx3 = idx.astype(jnp.int32).reshape(B, 1, S)           # lane-major index row

    itemsize = max(jnp.dtype(p.dtype).itemsize for p in points_list)
    tn = _pick_tn(N, S, itemsize)
    tiled = tn < N

    if tiled:
        grid = (B, N // tn)
        idx_spec = pl.BlockSpec((1, 1, S), lambda b, k: (b, 0, 0))
        pts_specs = [pl.BlockSpec((1, tn, p.shape[2]), lambda b, k: (b, k, 0))
                     for p in points_list]
        out_specs = tuple(pl.BlockSpec((1, p.shape[2], S), lambda b, k: (b, 0, 0))
                          for p in points_list)
        scratch = [pltpu.VMEM((p.shape[2], S), jnp.float32) for p in points_list]
        sems = ("parallel", "arbitrary")
    else:
        grid = (B,)
        idx_spec = pl.BlockSpec((1, 1, S), lambda b: (b, 0, 0))
        pts_specs = [pl.BlockSpec((1, N, p.shape[2]), lambda b: (b, 0, 0))
                     for p in points_list]
        out_specs = tuple(pl.BlockSpec((1, p.shape[2], S), lambda b: (b, 0, 0))
                          for p in points_list)
        scratch = []
        sems = ("parallel",)

    out_shapes = tuple(jax.ShapeDtypeStruct((B, p.shape[2], S), p.dtype) for p in points_list)

    outs = pl.pallas_call(
        _make_gather_kernel(len(points_list), tiled),
        out_shape=out_shapes,
        grid=grid,
        in_specs=[idx_spec] + pts_specs,
        out_specs=out_specs,
        scratch_shapes=scratch,
        compiler_params=pltpu.CompilerParams(dimension_semantics=sems),
    )(idx3, *points_list)
    if not isinstance(outs, (tuple, list)):
        outs = (outs,)
    # channel-major (B, C_i, S) -> (B, S, C_i)  (tiny post-kernel transpose)
    return [jnp.transpose(o, (0, 2, 1)) for o in outs]


# ------------------------------ module wrapper -------------------------------
class FarthestSubsample:
    """JAX/Pallas port of augerino_lib.augerino_utils.FarthestSubsample (forward only)."""

    def __init__(self, ds_frac=0.5, knn_channels=None):
        self.ds_frac = ds_frac
        self.knn_channels = knn_channels
        # TODO(synk): stateful FPS-index cache ('subsample_lookup' / cache=True) and custom
        # `distance` callables are not replicated; the kernel hardcodes squared Euclidean.

    def __call__(self, x, key, coords_only=False):
        coords, values, mask = x
        if self.ds_frac == 1:
            return coords if coords_only else x
        B, N, D = coords.shape
        npoint = int(np.round(N * self.ds_frac))

        # torch.randint(0, N, (B,)) -> deterministic jax.random equivalent
        init_farthest = jax.random.randint(key, (B,), 0, N, dtype=jnp.int32)
        fps_coords = coords[:, :, : self.knn_channels]
        fps_idx = farthest_point_sample_pallas(fps_coords, npoint, init_farthest)

        if coords_only:
            return index_points_pallas([coords], fps_idx)[0]

        mask_f = mask if jnp.issubdtype(mask.dtype, jnp.floating) else mask.astype(jnp.float32)
        gc, gv, gm = index_points_pallas([coords, values, mask_f[..., None]], fps_idx)
        new_mask = gm[..., 0].astype(mask.dtype)
        return (gc, gv, new_mask)


# ------------------------------ pure-JAX reference ---------------------------
def _fps_reference(coords, npoint, init_farthest):
    B, N, _ = coords.shape
    coords = coords.astype(jnp.float32)
    distances = jnp.full((B, N), 1e8, dtype=jnp.float32)
    farthest = init_farthest.astype(jnp.int32)
    centroids = jnp.zeros((B, npoint), dtype=jnp.int32)
    batch = jnp.arange(B)
    for i in range(npoint):
        centroids = centroids.at[:, i].set(farthest)
        centroid = coords[batch, farthest][:, None, :]            # (B, 1, D)
        dist = jnp.sum((coords - centroid) ** 2, axis=-1)
        distances = jnp.minimum(distances, dist)
        farthest = jnp.argmax(distances, axis=-1).astype(jnp.int32)
    return centroids


def _index_points_reference(points, idx):
    B = points.shape[0]
    return points[jnp.arange(B)[:, None], idx]


# ------------------------------------ main ------------------------------------
if __name__ == "__main__":
    key = jax.random.PRNGKey(0)
    kc, kv, ki = jax.random.split(key, 3)

    B, N, D, C = 2, 16, 3, 8
    coords = jax.random.normal(kc, (B, N, D), dtype=jnp.float32)
    values = jax.random.normal(kv, (B, N, C), dtype=jnp.float32)
    mask = jnp.ones((B, N), dtype=jnp.float32)

    module = FarthestSubsample(ds_frac=0.5, knn_channels=None)
    new_coords, new_values, new_mask = module((coords, values, mask), ki)
    jax.block_until_ready((new_coords, new_values, new_mask))

    npoint = N // 2
    assert new_coords.shape == (B, npoint, D)
    assert new_values.shape == (B, npoint, C)
    assert new_mask.shape == (B, npoint)

    # Cross-check against a pure-JAX reference (same init draw as inside the module).
    init_farthest = jax.random.randint(ki, (B,), 0, N, dtype=jnp.int32)
    ref_idx = _fps_reference(coords, npoint, init_farthest)
    got_idx = farthest_point_sample_pallas(coords, npoint, init_farthest)
    assert jnp.array_equal(got_idx, ref_idx), (got_idx, ref_idx)
    assert jnp.allclose(new_coords, _index_points_reference(coords, ref_idx), atol=1e-6)
    assert jnp.allclose(new_values, _index_points_reference(values, ref_idx), atol=1e-6)
    assert jnp.allclose(new_mask, _index_points_reference(mask[..., None], ref_idx)[..., 0], atol=1e-6)

    # coords_only path (single-tensor gather)
    co = module((coords, values, mask), ki, coords_only=True)
    jax.block_until_ready(co)
    assert co.shape == (B, npoint, D)
    assert jnp.allclose(co, new_coords, atol=1e-6)

    print("KERNEL_OK")
</pallas_src>

<mosaic_0001>
module attributes {stable_mosaic.version = 11 : i64} {
  func.func @_fps_kernel(%arg0: i32, %arg1: memref<2x1xi32, #tpu.memory_space<vmem>>, %arg2: memref<3x2x16xf32, #tpu.memory_space<vmem>>, %arg3: memref<2x8xi32, #tpu.memory_space<vmem>>, %arg4: memref<2x16xf32, #tpu.memory_space<vmem>>) attributes {dimension_semantics = [#tpu.dimension_semantics<parallel>], iteration_bounds = array<i64: 1>, scalar_prefetch = 0 : i64, scratch_operands = 1 : i64, tpu.core_type = #tpu.core_type<tc>, window_params = [{transform_indices = @transform_0, window_bounds = array<i64: 2, 1>}, {transform_indices = @transform_1, window_bounds = array<i64: 3, 2, 16>}, {transform_indices = @transform_2, window_bounds = array<i64: 2, 8>}]} {
    %0 = tpu.iota {dimensions = array<i32: 1>} : vector<2x16xi32>
    %1 = tpu.iota {dimensions = array<i32: 1>} : vector<2x8xi32>
    %cst = arith.constant 1.000000e+08 : f32
    %2 = vector.broadcast %cst : f32 to vector<2x16xf32>
    %c0 = arith.constant 0 : index
    %c0_0 = arith.constant 0 : index
    %3 = vector.load %arg4[%c0, %c0_0] : memref<2x16xf32, #tpu.memory_space<vmem>>, vector<2x16xf32>
    tpu.vector_store %arg4[%c0, %c0_0], %2 {strides = array<i32>} : memref<2x16xf32, #tpu.memory_space<vmem>>, vector<2x16xf32>,
    %c0_1 = arith.constant 0 : index
    %c0_2 = arith.constant 0 : index
    %4 = vector.load %arg1[%c0_1, %c0_2] : memref<2x1xi32, #tpu.memory_space<vmem>>, vector<2x1xi32>
    %c16_i32 = arith.constant 16 : i32
    %c0_i32 = arith.constant 0 : i32
    %c8_i32 = arith.constant 8 : i32
    %5 = arith.addi %c0_i32, %c8_i32 : i32
    %c1_i32 = arith.constant 1 : i32
    %6 = scf.for %arg5 = %c0_i32 to %5 step %c1_i32 iter_args(%arg6 = %4) -> (vector<2x1xi32>)  : i32 {
      %7 = vector.shape_cast %arg6 : vector<2x1xi32> to vector<2x1xi32>
      %8 = vector.broadcast %7 : vector<2x1xi32> to vector<2x8xi32>
      %9 = vector.broadcast %arg5 : i32 to vector<2x8xi32>
      %10 = arith.cmpi eq, %1, %9 : vector<2x8xi32>
      %c0_4 = arith.constant 0 : index
      %c0_5 = arith.constant 0 : index
      %11 = vector.load %arg3[%c0_4, %c0_5] : memref<2x8xi32, #tpu.memory_space<vmem>>, vector<2x8xi32>
      tpu.vector_store %arg3[%c0_4, %c0_5], %8 masked %10 {strides = array<i32>} : memref<2x8xi32, #tpu.memory_space<vmem>>, vector<2x8xi32>, vector<2x8xi1>
      %12 = vector.broadcast %arg6 : vector<2x1xi32> to vector<2x16xi32>
      %13 = arith.cmpi eq, %0, %12 : vector<2x16xi32>
      %14 = arith.extui %13 : vector<2x16xi1> to vector<2x16xi32>
      %15 = arith.sitofp %14 : vector<2x16xi32> to vector<2x16xf32>
      %c0_6 = arith.constant 0 : index
      %c0_7 = arith.constant 0 : index
      %c0_8 = arith.constant 0 : index
      %16 = vector.load %arg2[%c0_6, %c0_7, %c0_8] : memref<3x2x16xf32, #tpu.memory_space<vmem>>, vector<1x2x16xf32>
      %17 = vector.shape_cast %16 : vector<1x2x16xf32> to vector<2x16xf32>
      %18 = arith.mulf %17, %15 : vector<2x16xf32>
      %cst_9 = arith.constant dense<0.000000e+00> : vector<2xf32>
      %19 = vector.multi_reduction <add>, %18, %cst_9 [1] : vector<2x16xf32> to vector<2xf32>
      %20 = vector.shape_cast %19 : vector<2xf32> to vector<2x1xf32>
      %21 = vector.broadcast %20 : vector<2x1xf32> to vector<2x16xf32>
      %22 = arith.subf %17, %21 : vector<2x16xf32>
      %23 = arith.mulf %22, %22 : vector<2x16xf32>
      %c1 = arith.constant 1 : index
      %c0_10 = arith.constant 0 : index
      %c0_11 = arith.constant 0 : index
      %24 = vector.load %arg2[%c1, %c0_10, %c0_11] : memref<3x2x16xf32, #tpu.memory_space<vmem>>, vector<1x2x16xf32>
      %25 = vector.shape_cast %24 : vector<1x2x16xf32> to vector<2x16xf32>
      %26 = arith.mulf %25, %15 : vector<2x16xf32>
      %cst_12 = arith.constant dense<0.000000e+00> : vector<2xf32>
      %27 = vector.multi_reduction <add>, %26, %cst_12 [1] : vector<2x16xf32> to vector<2xf32>
      %28 = vector.shape_cast %27 : vector<2xf32> to vector<2x1xf32>
      %29 = vector.broadcast %28 : vector<2x1xf32> to vector<2x16xf32>
      %30 = arith.subf %25, %29 : vector<2x16xf32>
      %31 = arith.mulf %30, %30 : vector<2x16xf32>
      %32 = arith.addf %23, %31 : vector<2x16xf32>
      %c2 = arith.constant 2 : index
      %c0_13 = arith.constant 0 : index
      %c0_14 = arith.constant 0 : index
      %33 = vector.load %arg2[%c2, %c0_13, %c0_14] : memref<3x2x16xf32, #tpu.memory_space<vmem>>, vector<1x2x16xf32>
      %34 = vector.shape_cast %33 : vector<1x2x16xf32> to vector<2x16xf32>
      %35 = arith.mulf %34, %15 : vector<2x16xf32>
      %cst_15 = arith.constant dense<0.000000e+00> : vector<2xf32>
      %36 = vector.multi_reduction <add>, %35, %cst_15 [1] : vector<2x16xf32> to vector<2xf32>
      %37 = vector.shape_cast %36 : vector<2xf32> to vector<2x1xf32>
      %38 = vector.broadcast %37 : vector<2x1xf32> to vector<2x16xf32>
      %39 = arith.subf %34, %38 : vector<2x16xf32>
      %40 = arith.mulf %39, %39 : vector<2x16xf32>
      %41 = arith.addf %32, %40 : vector<2x16xf32>
      %c0_16 = arith.constant 0 : index
      %c0_17 = arith.constant 0 : index
      %42 = vector.load %arg4[%c0_16, %c0_17] : memref<2x16xf32, #tpu.memory_space<vmem>>, vector<2x16xf32>
      %43 = arith.minimumf %42, %41 : vector<2x16xf32>
      %c0_18 = arith.constant 0 : index
      %c0_19 = arith.constant 0 : index
      %44 = vector.load %arg4[%c0_18, %c0_19] : memref<2x16xf32, #tpu.memory_space<vmem>>, vector<2x16xf32>
      tpu.vector_store %arg4[%c0_18, %c0_19], %43 {strides = array<i32>} : memref<2x16xf32, #tpu.memory_space<vmem>>, vector<2x16xf32>,
      %cst_20 = arith.constant dense<0xFF800000> : vector<2xf32>
      %45 = vector.multi_reduction <maximumf>, %43, %cst_20 [1] : vector<2x16xf32> to vector<2xf32>
      %46 = vector.shape_cast %45 : vector<2xf32> to vector<2x1xf32>
      %47 = vector.broadcast %46 : vector<2x1xf32> to vector<2x16xf32>
      %48 = arith.cmpf oeq, %43, %47 : vector<2x16xf32>
      %49 = vector.broadcast %c16_i32 : i32 to vector<2x16xi32>
      %50 = arith.select %48, %0, %49 : vector<2x16xi1>, vector<2x16xi32>
      %cst_21 = arith.constant dense<2147483647> : vector<2xi32>
      %51 = vector.multi_reduction <minsi>, %50, %cst_21 [1] : vector<2x16xi32> to vector<2xi32>
      %52 = vector.shape_cast %51 : vector<2xi32> to vector<2x1xi32>
      scf.yield %52 : vector<2x1xi32>
    }
    %c8_i32_3 = arith.constant 8 : i32
    return
  }
  func.func @transform_0(%arg0: i32) -> (i32, i32) {
    %c0_i32 = arith.constant 0 : i32
    %c0_i32_0 = arith.constant 0 : i32
    return %arg0, %c0_i32 : i32, i32
  }
  func.func @transform_1(%arg0: i32) -> (i32, i32, i32) {
    %c0_i32 = arith.constant 0 : i32
    %c0_i32_0 = arith.constant 0 : i32
    %c0_i32_1 = arith.constant 0 : i32
    return %c0_i32, %arg0, %c0_i32_0 : i32, i32, i32
  }
  func.func @transform_2(%arg0: i32) -> (i32, i32) {
    %c0_i32 = arith.constant 0 : i32
    %c0_i32_0 = arith.constant 0 : i32
    return %arg0, %c0_i32 : i32, i32
  }
}

</mosaic_0001>

<llo_original>
// kernel: tpu_custom_call.1
$region0: #{tpu_custom_call.1}
  #allocation0 [shape = 'u32[]', space=smem, size = 0x4, offset = 0x4, fixed_abs, tag = 'smem constant byte address 0x4 - core index']
  #allocation1 [shape = 'u32[72,128]{1,0:T(1,128)}', space=vmem, size = 0x9000, scoped, tag = 'internal scratch']
  #allocation2 [shape = 'f32[2,16]{1,0:T(2,128)}', space=vmem, size = 0x400, scoped, tag = 'scratch operand']
  %s0 = inlined_call_operand.vmem [shape: s32[2,1], index: 0, kind: input, shape index: {}]
  %s1 = inlined_call_operand.hbm [shape: f32[3,2,16], index: 1, kind: input, shape index: {}]
  %s2 = inlined_call_operand.hbm [shape: s32[2,8], index: 2, kind: output, shape index: {}]
  %s3 = sld [smem:[#allocation0]]
  $region29: #{tpu_custom_call.1} parent=0
    _
  %s5 = ssub.s32 1, %s3
  %s6 = scalar_select 0, %s5, %s3
  $region1: #{tpu_custom_call.1} parent=0
    #allocation3 [shape = 'u8[3072]{0}', space=vmem, size = 0xc00, scoped, tag = 'input window, operand 1, single buffered']
    #allocation4 [shape = 's32[1]{0}', space=sflag, size = 0x4, scoped, tag = 'scoped memory for tpu_custom_call.1']
    #allocation5 [shape = 's32[1]{0}', space=sflag, size = 0x4, scoped, tag = 'scoped memory for tpu_custom_call.1']
    #allocation6 [shape = 'u8[1024]{0}', space=vmem, size = 0x400, scoped, tag = 'output window, operand 0, single buffered']
    %7 = vsyncpa [#allocation4], 0
    %8 = vsyncpa [#allocation5], 0
    // Predicated region
    $region2: #{tpu_custom_call.1} parent=1 // pred_check
      _
    $region3: #{tpu_custom_call.1} parent=1 // pred_check_branch
      %10 = sbr.rel (0) target = $region5
    $region4: #{tpu_custom_call.1} parent=1 // pred_region
      _
    $region5: #{tpu_custom_call.1} parent=1 // pred_fallthru
      _
    // Predicated region
    $region6: #{tpu_custom_call.1} parent=1 // pred_check
      _
    $region7: #{tpu_custom_call.1} parent=1 // pred_check_branch
      %12 = sbr.rel (0) target = $region9
    $region8: #{tpu_custom_call.1} parent=1 // pred_region
      %14 = vsyncadd [#allocation4], 0
      %s15 = sshll.u32 %s1, 4
      %s16 = int_to_ptr.hbm [resolvable:$true] %s15
      %s17 = sshll.u32 [#allocation3], 4
      %s18 = int_to_ptr.vmem [resolvable:$true] %s17
      %23 = dma.hbm_to_vmem [thread:$0]  %s16, 96, %s18, [#allocation4], 32, 32, 2
    $region9: #{tpu_custom_call.1} parent=1 // pred_fallthru
      _
    // Predicated region
    $region10: #{tpu_custom_call.1} parent=1 // pred_check
      _
    $region11: #{tpu_custom_call.1} parent=1 // pred_check_branch
      %25 = sbr.rel (0) target = $region13
    $region12: #{tpu_custom_call.1} parent=1 // pred_region
      %27 = dma.done [#allocation4], 96
    $region13: #{tpu_custom_call.1} parent=1 // pred_fallthru
      _
    %v28 = vlaneseq
    %v29 = vand.u32 %v28, 127
    %vm30 = vcmask 123904
    %31 = vst.msk [vmem:[#allocation2] sm:$0x3] %vm30, 1e+08
    %v32 = vld [vmem:[%s0] sm:$0x3]
    loop: start=0, step=1, limit=8
    $region14: #{tpu_custom_call.1} parent=1 // loop_pre_header
      _
    $region15: #{tpu_custom_call.1} parent=1 // loop_header
      %s34 = sphi 0, %s38
      %p35 = scmp.ge.s32.totalorder %s34, 8
      %v39 = vphi %v32, %v98
    $region16: #{tpu_custom_call.1} parent=1 // loop_header_branch
      %37 = sbr.rel (%p35) target = $region20
    $region17: #{tpu_custom_call.1} parent=1 // loop_body
      %40 = vset.pattern.permute.xlu0 0
      %41 = vperm.xlu0 %40, %v39
      %v42 = vpop.permute.xlu0 %41
      %v43 = vstv %s34
      %vm44 = vcmp.eq.s32.totalorder %v29, %v43
      %vm45 = vcmask 58368
      %vm46 = vmand %vm45, %vm44
      %47 = vst.msk [vmem:[#allocation6] sm:$0x3] %vm46, %v42
      %vm48 = vcmp.eq.s32.totalorder %v29, %v42
      %v49 = vsel %vm48, 1, 0
      %v50 = vcvt.s32.f32 %v49
      %v51 = vld [vmem:[#allocation3] sm:$0x3]
      %v52 = vmul.f32 %v51, %v50
      %v53 = vsel %vm30, %v52, 0.0
      %54 = vadd.xlane.f32.xlu0 %v53
      %v55 = vpop.xlane.xlu0 %54
      %v56 = vsub.f32 %v51, %v55
      %v57 = vmul.f32 %v56, %v56
      %s58 = scalar_lea.vmem [#allocation3], 2
      %v59 = vld [vmem:[%s58] sm:$0x3]
      %v60 = vmul.f32 %v59, %v50
      %v61 = vsel %vm30, %v60, 0.0
      %62 = vadd.xlane.f32.xlu0 %v61
      %v63 = vpop.xlane.xlu0 %62
      %v64 = vsub.f32 %v59, %v63
      %v65 = vmul.f32 %v64, %v64
      %v66 = vadd.f32 %v57, %v65
      %s67 = scalar_lea.vmem [#allocation3], 4
      %v68 = vld [vmem:[%s67] sm:$0x3]
      %v69 = vmul.f32 %v68, %v50
      %v70 = vsel %vm30, %v69, 0.0
      %71 = vadd.xlane.f32.xlu0 %v70
      %v72 = vpop.xlane.xlu0 %71
      %v73 = vsub.f32 %v68, %v72
      %v74 = vmul.f32 %v73, %v73
      %v75 = vadd.f32 %v66, %v74
      %v76 = vld [vmem:[#allocation2] sm:$0x3]
      %v77 = vmin.f32 %v76, %v75
      %78 = vst.msk [vmem:[#allocation2] sm:$0x3] %vm30, %v77
      %v79 = vsel %vm30, %v77, -inf
      %80 = vmax.xlane.f32.xlu0 %v79
      %v81 = vpop.xlane.xlu0 %80
      %vm82 = vcmp.eq.f32.partialorder %v77, %v81
      %v83 = vsel %vm82, %v29, 16
      %v84 = vsel %vm30, %v83, 2147483647
      %v85 = vand.u32 %v84, 65535
      %v86 = vshra.s32 %v84, 16
      %v87 = vcvt.s32.f32 %v85
      %v88 = vcvt.s32.f32 %v86
      %89 = vmin.xlane.f32.xlu0 %v88
      %v90 = vpop.xlane.xlu0 %89
      %vm91 = vcmp.eq.f32.partialorder %v88, %v90
      %v92 = vsel %vm91, %v87, inf
      %93 = vmin.xlane.f32.xlu0 %v92
      %v94 = vpop.xlane.xlu0 %93
      %v95 = vcvt.f32.s32 %v94
      %v96 = vcvt.f32.s32 %v90
      %v97 = vshll.u32 %v96, 16
      %v98 = vadd.s32 %v97, %v95
    $region18: #{tpu_custom_call.1} parent=1 // loop_footer
      %s38 = sadd.s32 1, %s34
    $region19: #{tpu_custom_call.1} parent=1 // loop_footer_branch
      %33 = sbr.rel target = $region15
    $region20: #{tpu_custom_call.1} parent=1 // loop_exit
      _
    // Predicated region
    $region21: #{tpu_custom_call.1} parent=1 // pred_check
      _
    $region22: #{tpu_custom_call.1} parent=1 // pred_check_branch
      %100 = sbr.rel (0) target = $region24
    $region23: #{tpu_custom_call.1} parent=1 // pred_region
      %102 = vsyncadd [#allocation5], 0
      %s104 = sshll.u32 [#allocation6], 4
      %s105 = int_to_ptr.vmem [resolvable:$true] %s104
      %s106 = sshll.u32 %s2, 4
      %s107 = int_to_ptr.hbm [resolvable:$true] %s106
      %109 = dma.vmem_to_hbm [thread:$0]  %s105, 32, %s107, [#allocation5]
    $region24: #{tpu_custom_call.1} parent=1 // pred_fallthru
      _
    // Predicated region
    $region25: #{tpu_custom_call.1} parent=1 // pred_check
      _
    $region26: #{tpu_custom_call.1} parent=1 // pred_check_branch
      %111 = sbr.rel (0) target = $region28
    $region27: #{tpu_custom_call.1} parent=1 // pred_region
      %113 = dma.done [#allocation5], 32
    $region28: #{tpu_custom_call.1} parent=1 // pred_fallthru
      _
    %114 = vsyncpa [#allocation4], 1
    %115 = vsyncpa [#allocation5], 1

</llo_original>
